<compile_context>
chip_gen: v7x
topology: tpu7x:2x2x1
jax: 0.10.0
libtpu: 0.0.40
codegen_flags: <defaults>
</compile_context>

<pallas_src>
import functools

import numpy as np
import jax
import jax.numpy as jnp
from jax.experimental import pallas as pl
from jax.experimental.pallas import tpu as pltpu


def _reflect_pad_kernel(x_ref, o_ref, *, h, w, oh, ow):
    # x_ref : (B, H,  W )  block of input planes
    # o_ref : (B, OH, OW)  block of padded output planes
    #
    # Interior: straight copy in the input dtype (no casts, no matmuls).
    o_ref[:, :h, :w] = x_ref[...]

    # Right strip: out[:, :h, w+j] = x[:, :, w-2-j]   (PyTorch 'reflect', edge excluded)
    for j in range(ow - w):
        o_ref[:, :h, w + j : w + j + 1] = x_ref[:, :, w - 2 - j : w - 1 - j]

    # Bottom strip (includes the bottom-right corner automatically because the
    # source rows already contain their right-pad): out[h+i, :] = out[h-2-i, :]
    for i in range(oh - h):
        o_ref[:, h + i : h + i + 1, :] = o_ref[:, h - 2 - i : h - 1 - i, :]


def pad_to_scale(img: jax.Array, net_scale: int) -> jax.Array:
    """JAX/Pallas equivalent of BaseNet.padToScale (NCHW, reflect pad to multiple)."""
    n, c, h, w = img.shape
    oh = int(np.ceil(h * 1.0 / net_scale) * net_scale)
    ow = int(np.ceil(w * 1.0 / net_scale) * net_scale)
    pad_h, pad_w = oh - h, ow - w
    # Same constraint as F.pad(mode='reflect'): pad must be < input dim.
    assert pad_h < h and pad_w < w, "reflect pad must be smaller than input dim"

    if pad_h == 0 and pad_w == 0:
        return img  # already a multiple of net_scale; reflect pad is identity

    # Fold (N, C) into one plane axis: squeezes the singleton block dims and
    # lets us coarsen the grid (multiple planes per step).
    p = n * c
    x2 = img.reshape(p, h, w)

    itemsize = img.dtype.itemsize
    bytes_per_plane = (h * w + oh * ow) * itemsize

    # Block of planes per grid step: aim for ~2 MiB of in+out traffic per step
    # (fewer, fatter DMAs -> near-roofline HBM bandwidth), but keep >= 2 grid
    # steps when possible so v7x's two TensorCores both get work.
    budget = 2 * 1024 * 1024
    blk = max(1, min(p, budget // max(1, bytes_per_plane)))
    if p >= 2:
        blk = min(blk, (p + 1) // 2)
    grid = (pl.cdiv(p, blk),)

    # VMEM: double-buffered input + output blocks, with headroom; stay well
    # under v7x's 64 MiB physical VMEM.
    # TODO(synk): for very large planes (e.g. 1080x1920 f32) a single plane
    # block exceeds this budget; that needs an additional H tile with special
    # handling of the bottom reflect strip — not required at these shapes.
    vmem_needed = 2 * blk * bytes_per_plane
    vmem_limit = int(min(64 * 1024 * 1024, max(8 * 1024 * 1024, 2 * vmem_needed)))

    kernel = functools.partial(_reflect_pad_kernel, h=h, w=w, oh=oh, ow=ow)

    out2 = pl.pallas_call(
        kernel,
        out_shape=jax.ShapeDtypeStruct((p, oh, ow), img.dtype),
        grid=grid,
        in_specs=[pl.BlockSpec((blk, h, w), lambda i: (i, 0, 0))],
        out_specs=pl.BlockSpec((blk, oh, ow), lambda i: (i, 0, 0)),
        compiler_params=pltpu.CompilerParams(
            dimension_semantics=("parallel",),
            vmem_limit_bytes=vmem_limit,
        ),
        cost_estimate=pl.CostEstimate(
            flops=0,
            transcendentals=0,
            bytes_accessed=p * (h * w + oh * ow) * itemsize,
        ),
    )(x2)

    return out2.reshape(n, c, oh, ow)


class BaseNetJax:
    """Minimal JAX mirror of BaseNet: holds init config, exposes padToScale.

    forward() is abstract in the reference module, and randomInitNet /
    initPreweight are weight-initialization helpers for (absent) submodules,
    so no parameters are created here.
    """

    def __init__(self, netInitType: str = "xavier", netInitGain: float = 0.2,
                 netNormAffine: bool = True):
        self.netInitType = netInitType
        self.netInitGain = netInitGain
        self.netNormAffine = netNormAffine

    def forward(self, *inputs):
        raise NotImplementedError

    @staticmethod
    def padToScale(img: jax.Array, netScale: int) -> jax.Array:
        return pad_to_scale(img, netScale)

    # TODO(synk): initPreweight / getWeight load .pt checkpoints from disk and
    # randomInitNet initializes (absent) submodules — not applicable to this
    # synthetic, file-free kernel script.


if __name__ == "__main__":
    key = jax.random.PRNGKey(0)
    N, C, H, W = 2, 4, 16, 16
    net_scale = 5  # -> output spatial 20 x 20 (reflect-padded)

    x = jax.random.normal(key, (N, C, H, W), dtype=jnp.float32)

    net = BaseNetJax(netInitType="xavier", netInitGain=0.2, netNormAffine=True)
    y = net.padToScale(x, net_scale)
    y = jax.block_until_ready(y)

    # Reference check against jnp.pad reflect (same semantics as F.pad 'reflect').
    oh = int(np.ceil(H / net_scale) * net_scale)
    ow = int(np.ceil(W / net_scale) * net_scale)
    y_ref = jnp.pad(x, ((0, 0), (0, 0), (0, oh - H), (0, ow - W)), mode="reflect")
    assert y.shape == (N, C, oh, ow), y.shape
    np.testing.assert_allclose(np.asarray(y), np.asarray(y_ref), rtol=0, atol=0)

    print("KERNEL_OK")
</pallas_src>

<mosaic_0001>
module attributes {stable_mosaic.version = 11 : i64} {
  func.func @_reflect_pad_kernel(%arg0: i32, %arg1: memref<4x16x16xf32, #tpu.memory_space<vmem>>, %arg2: memref<4x20x20xf32, #tpu.memory_space<vmem>>) attributes {dimension_semantics = [#tpu.dimension_semantics<parallel>], iteration_bounds = array<i64: 2>, scalar_prefetch = 0 : i64, scratch_operands = 0 : i64, tpu.core_type = #tpu.core_type<tc>, window_params = [{transform_indices = @transform_0, window_bounds = array<i64: 4, 16, 16>}, {transform_indices = @transform_1, window_bounds = array<i64: 4, 20, 20>}]} {
    %c0 = arith.constant 0 : index
    %c0_0 = arith.constant 0 : index
    %c0_1 = arith.constant 0 : index
    %0 = vector.load %arg1[%c0, %c0_0, %c0_1] : memref<4x16x16xf32, #tpu.memory_space<vmem>>, vector<4x16x16xf32>
    %c0_2 = arith.constant 0 : index
    %c0_3 = arith.constant 0 : index
    %c0_4 = arith.constant 0 : index
    %1 = vector.load %arg2[%c0_2, %c0_3, %c0_4] : memref<4x20x20xf32, #tpu.memory_space<vmem>>, vector<4x16x16xf32>
    tpu.vector_store %arg2[%c0_2, %c0_3, %c0_4], %0 {strides = array<i32>} : memref<4x20x20xf32, #tpu.memory_space<vmem>>, vector<4x16x16xf32>,
    %c0_5 = arith.constant 0 : index
    %c0_6 = arith.constant 0 : index
    %c14 = arith.constant 14 : index
    %2 = vector.load %arg1[%c0_5, %c0_6, %c14] : memref<4x16x16xf32, #tpu.memory_space<vmem>>, vector<4x16x1xf32>
    %c0_7 = arith.constant 0 : index
    %c0_8 = arith.constant 0 : index
    %c16 = arith.constant 16 : index
    %3 = vector.load %arg2[%c0_7, %c0_8, %c16] : memref<4x20x20xf32, #tpu.memory_space<vmem>>, vector<4x16x1xf32>
    tpu.vector_store %arg2[%c0_7, %c0_8, %c16], %2 {strides = array<i32>} : memref<4x20x20xf32, #tpu.memory_space<vmem>>, vector<4x16x1xf32>,
    %c0_9 = arith.constant 0 : index
    %c0_10 = arith.constant 0 : index
    %c13 = arith.constant 13 : index
    %4 = vector.load %arg1[%c0_9, %c0_10, %c13] : memref<4x16x16xf32, #tpu.memory_space<vmem>>, vector<4x16x1xf32>
    %c0_11 = arith.constant 0 : index
    %c0_12 = arith.constant 0 : index
    %c17 = arith.constant 17 : index
    %5 = vector.load %arg2[%c0_11, %c0_12, %c17] : memref<4x20x20xf32, #tpu.memory_space<vmem>>, vector<4x16x1xf32>
    tpu.vector_store %arg2[%c0_11, %c0_12, %c17], %4 {strides = array<i32>} : memref<4x20x20xf32, #tpu.memory_space<vmem>>, vector<4x16x1xf32>,
    %c0_13 = arith.constant 0 : index
    %c0_14 = arith.constant 0 : index
    %c12 = arith.constant 12 : index
    %6 = vector.load %arg1[%c0_13, %c0_14, %c12] : memref<4x16x16xf32, #tpu.memory_space<vmem>>, vector<4x16x1xf32>
    %c0_15 = arith.constant 0 : index
    %c0_16 = arith.constant 0 : index
    %c18 = arith.constant 18 : index
    %7 = vector.load %arg2[%c0_15, %c0_16, %c18] : memref<4x20x20xf32, #tpu.memory_space<vmem>>, vector<4x16x1xf32>
    tpu.vector_store %arg2[%c0_15, %c0_16, %c18], %6 {strides = array<i32>} : memref<4x20x20xf32, #tpu.memory_space<vmem>>, vector<4x16x1xf32>,
    %c0_17 = arith.constant 0 : index
    %c0_18 = arith.constant 0 : index
    %c11 = arith.constant 11 : index
    %8 = vector.load %arg1[%c0_17, %c0_18, %c11] : memref<4x16x16xf32, #tpu.memory_space<vmem>>, vector<4x16x1xf32>
    %c0_19 = arith.constant 0 : index
    %c0_20 = arith.constant 0 : index
    %c19 = arith.constant 19 : index
    %9 = vector.load %arg2[%c0_19, %c0_20, %c19] : memref<4x20x20xf32, #tpu.memory_space<vmem>>, vector<4x16x1xf32>
    tpu.vector_store %arg2[%c0_19, %c0_20, %c19], %8 {strides = array<i32>} : memref<4x20x20xf32, #tpu.memory_space<vmem>>, vector<4x16x1xf32>,
    %c0_21 = arith.constant 0 : index
    %c14_22 = arith.constant 14 : index
    %c0_23 = arith.constant 0 : index
    %10 = vector.load %arg2[%c0_21, %c14_22, %c0_23] : memref<4x20x20xf32, #tpu.memory_space<vmem>>, vector<4x1x20xf32>
    %c0_24 = arith.constant 0 : index
    %c16_25 = arith.constant 16 : index
    %c0_26 = arith.constant 0 : index
    %11 = vector.load %arg2[%c0_24, %c16_25, %c0_26] : memref<4x20x20xf32, #tpu.memory_space<vmem>>, vector<4x1x20xf32>
    tpu.vector_store %arg2[%c0_24, %c16_25, %c0_26], %10 {strides = array<i32>} : memref<4x20x20xf32, #tpu.memory_space<vmem>>, vector<4x1x20xf32>,
    %c0_27 = arith.constant 0 : index
    %c13_28 = arith.constant 13 : index
    %c0_29 = arith.constant 0 : index
    %12 = vector.load %arg2[%c0_27, %c13_28, %c0_29] : memref<4x20x20xf32, #tpu.memory_space<vmem>>, vector<4x1x20xf32>
    %c0_30 = arith.constant 0 : index
    %c17_31 = arith.constant 17 : index
    %c0_32 = arith.constant 0 : index
    %13 = vector.load %arg2[%c0_30, %c17_31, %c0_32] : memref<4x20x20xf32, #tpu.memory_space<vmem>>, vector<4x1x20xf32>
    tpu.vector_store %arg2[%c0_30, %c17_31, %c0_32], %12 {strides = array<i32>} : memref<4x20x20xf32, #tpu.memory_space<vmem>>, vector<4x1x20xf32>,
    %c0_33 = arith.constant 0 : index
    %c12_34 = arith.constant 12 : index
    %c0_35 = arith.constant 0 : index
    %14 = vector.load %arg2[%c0_33, %c12_34, %c0_35] : memref<4x20x20xf32, #tpu.memory_space<vmem>>, vector<4x1x20xf32>
    %c0_36 = arith.constant 0 : index
    %c18_37 = arith.constant 18 : index
    %c0_38 = arith.constant 0 : index
    %15 = vector.load %arg2[%c0_36, %c18_37, %c0_38] : memref<4x20x20xf32, #tpu.memory_space<vmem>>, vector<4x1x20xf32>
    tpu.vector_store %arg2[%c0_36, %c18_37, %c0_38], %14 {strides = array<i32>} : memref<4x20x20xf32, #tpu.memory_space<vmem>>, vector<4x1x20xf32>,
    %c0_39 = arith.constant 0 : index
    %c11_40 = arith.constant 11 : index
    %c0_41 = arith.constant 0 : index
    %16 = vector.load %arg2[%c0_39, %c11_40, %c0_41] : memref<4x20x20xf32, #tpu.memory_space<vmem>>, vector<4x1x20xf32>
    %c0_42 = arith.constant 0 : index
    %c19_43 = arith.constant 19 : index
    %c0_44 = arith.constant 0 : index
    %17 = vector.load %arg2[%c0_42, %c19_43, %c0_44] : memref<4x20x20xf32, #tpu.memory_space<vmem>>, vector<4x1x20xf32>
    tpu.vector_store %arg2[%c0_42, %c19_43, %c0_44], %16 {strides = array<i32>} : memref<4x20x20xf32, #tpu.memory_space<vmem>>, vector<4x1x20xf32>,
    return
  }
  func.func @transform_0(%arg0: i32) -> (i32, i32, i32) {
    %c0_i32 = arith.constant 0 : i32
    %c0_i32_0 = arith.constant 0 : i32
    %c0_i32_1 = arith.constant 0 : i32
    return %arg0, %c0_i32, %c0_i32_0 : i32, i32, i32
  }
  func.func @transform_1(%arg0: i32) -> (i32, i32, i32) {
    %c0_i32 = arith.constant 0 : i32
    %c0_i32_0 = arith.constant 0 : i32
    %c0_i32_1 = arith.constant 0 : i32
    return %arg0, %c0_i32, %c0_i32_0 : i32, i32, i32
  }
}

</mosaic_0001>

<llo_original>
// kernel: tpu_custom_call.1
$region0: #{tpu_custom_call.1}
  #allocation0 [shape = 'u32[]', space=smem, size = 0x4, offset = 0x4, fixed_abs, tag = 'smem constant byte address 0x4 - core index']
  #allocation1 [shape = 'u32[144,128]{1,0:T(1,128)}', space=vmem, size = 0x12000, scoped, tag = 'internal scratch']
  %s0 = inlined_call_operand.hbm [shape: f32[8,16,16], index: 0, kind: input, shape index: {}]
  %s1 = inlined_call_operand.vmem [shape: f32[8,20,20], index: 1, kind: output, shape index: {}]
  %s2 = sld [smem:[#allocation0]]
  $region41: #{tpu_custom_call.1} parent=0
    _
  %s4 = ssub.s32 1, %s2
  %s5 = scalar_select 0, %s4, %s2
  $region1: #{tpu_custom_call.1} parent=0
    #allocation2 [shape = 'u8[65536]{0}', space=vmem, size = 0x10000, scoped, tag = 'input window, operand 0']
    #allocation3 [shape = 's32[2]{0}', space=sflag, size = 0x8, scoped, tag = 'scoped memory for tpu_custom_call.1']
    %6 = vsyncpa [#allocation3], 0
    %s7 = scalar_lea.sflag [#allocation3], 1
    %8 = vsyncpa %s7, 0
    loop: start=0, step=1, limit=4
    $region2: #{tpu_custom_call.1} parent=1 // loop_pre_header
      _
    $region3: #{tpu_custom_call.1} parent=1 // loop_header
      %s10 = sphi 0, %s14
      %p11 = scmp.ge.s32.totalorder %s10, 4
      %s20 = sphi 0, %s22
      %s23 = sphi 0, %s20
      %s24 = sphi 0, %s23
      %s40 = sphi 0, %s24
      %s46 = sphi 0, %s48
      %s49 = sphi 0, %s46
      %s50 = sphi 0, %s49
      %s66 = sphi 0, %s50
    $region4: #{tpu_custom_call.1} parent=1 // loop_header_branch
      %13 = sbr.rel (%p11) target = $region8
    $region5: #{tpu_custom_call.1} parent=1 // loop_body
      %s15 = ssub.s32 %s10, 1
      %s16 = ssub.s32 %s10, 2
      %s17 = sadd.s32 %s10, 1
      %s18 = ssub.s32 %s10, %s17
      %p19 = scmp.eq.s32.totalorder %s18, 0
      %s21 = sadd.s32 %s20, 1
      %s22 = scalar_select %p19, %s20, %s21
      %p25 = pneg %p19
      %p26 = scmp.eq.s32.totalorder %s10, 1
      %p27 = por %p25, %p26
      %p28 = scmp.ne.s32.totalorder %s20, %s23
      %p29 = scmp.eq.s32.totalorder %s10, 0
      %p30 = por %p28, %p29
      %p31 = scmp.ne.s32.totalorder %s20, %s23
      %p32 = scmp.eq.s32.totalorder %s15, 1
      %p33 = por %p31, %p32
      %p34 = scmp.ne.s32.totalorder %s23, %s24
      %p35 = scmp.eq.s32.totalorder %s15, 0
      %p36 = por %p34, %p35
      %p37 = scmp.ne.s32.totalorder %s23, %s24
      %p38 = scmp.eq.s32.totalorder %s16, 1
      %p39 = por %p37, %p38
      %p41 = scmp.ne.s32.totalorder %s24, %s40
      %p42 = scmp.eq.s32.totalorder %s16, 0
      %p43 = por %p41, %p42
      %s44 = ssub.s32 %s10, %s17
      %p45 = scmp.eq.s32.totalorder %s44, 0
      %s47 = sadd.s32 %s46, 1
      %s48 = scalar_select %p45, %s46, %s47
      %p51 = pneg %p45
      %p52 = scmp.eq.s32.totalorder %s10, 1
      %p53 = por %p51, %p52
      %p54 = scmp.ne.s32.totalorder %s46, %s49
      %p55 = scmp.eq.s32.totalorder %s10, 0
      %p56 = por %p54, %p55
      %p57 = scmp.ne.s32.totalorder %s46, %s49
      %p58 = scmp.eq.s32.totalorder %s15, 1
      %p59 = por %p57, %p58
      %p60 = scmp.ne.s32.totalorder %s49, %s50
      %p61 = scmp.eq.s32.totalorder %s15, 0
      %p62 = por %p60, %p61
      %p63 = scmp.ne.s32.totalorder %s49, %s50
      %p64 = scmp.eq.s32.totalorder %s16, 1
      %p65 = por %p63, %p64
      %p67 = scmp.ne.s32.totalorder %s50, %s66
      %p68 = scmp.eq.s32.totalorder %s16, 0
      %p69 = por %p67, %p68
      %p70 = scmp.le.s32.totalorder 1, %s10
      %p71 = scmp.lt.s32.totalorder %s10, 3
      %p72 = pnand %p70, %p71
      %p73 = pneg %p72
      // Predicated region
      $region9: #{tpu_custom_call.1} parent=5 // pred_check
        _
      $region10: #{tpu_custom_call.1} parent=5 // pred_check_branch
        %75 = sbr.rel (%p72) target = $region12
      $region11: #{tpu_custom_call.1} parent=5 // pred_region
        %s76 = ssub.s32 %s10, 1
      $region12: #{tpu_custom_call.1} parent=5 // pred_fallthru
        _
      %p77 = scmp.lt.s32.totalorder %s10, 2
      // Predicated region
      $region13: #{tpu_custom_call.1} parent=5 // pred_check
        %p78 = pneg %p77
      $region14: #{tpu_custom_call.1} parent=5 // pred_check_branch
        %80 = sbr.rel (%p78) target = $region16
      $region15: #{tpu_custom_call.1} parent=5 // pred_region
        // Predicated region
        $region17: #{tpu_custom_call.1} parent=15 // pred_check
          %p81 = pneg %p30
        $region18: #{tpu_custom_call.1} parent=15 // pred_check_branch
          %83 = sbr.rel (%p81) target = $region20
        $region19: #{tpu_custom_call.1} parent=15 // pred_region
          %s84 = sand.u32 %s20, 1
          %s85 = scalar_lea.sflag [#allocation3], %s84
          %s86 = sand.u32 %s20, 1
          %s87 = smul.addr %s86, 64
          %s88 = scalar_lea.vmem [#allocation2], %s87
          %s89 = smul.u32 4, %s10
          %s91 = ssub.s32 1024, 1024
          %92 = vsyncadd %s85, %s91
          %s93 = smul.addr %s89, 2
          %s94 = smul.addr %s93, 128
          %s95 = scalar_lea.hbm %s0, %s94
          %s96 = sshll.u32 %s88, 4
          %s97 = int_to_ptr.vmem [resolvable:$true] %s96
          %102 = dma.hbm_to_vmem [thread:$0]  %s95, 1024, %s97, %s85, 128, 128, 8
        $region20: #{tpu_custom_call.1} parent=15 // pred_fallthru
          _
      $region16: #{tpu_custom_call.1} parent=5 // pred_fallthru
        _
      %p103 = scmp.le.s32.totalorder 1, %s10
      %p104 = scmp.lt.s32.totalorder %s10, 3
      %p105 = pnand %p103, %p104
      %p106 = pneg %p105
      // Predicated region
      $region21: #{tpu_custom_call.1} parent=5 // pred_check
        _
      $region22: #{tpu_custom_call.1} parent=5 // pred_check_branch
        %108 = sbr.rel (%p105) target = $region24
      $region23: #{tpu_custom_call.1} parent=5 // pred_region
        %s109 = ssub.s32 %s10, 1
        %s110 = sand.u32 %s23, 1
        %s111 = scalar_lea.sflag [#allocation3], %s110
        %s112 = sand.u32 %s23, 1
        %s113 = smul.addr %s112, 64
        %s114 = scalar_lea.vmem [#allocation2], %s113
        // Predicated region
        $region25: #{tpu_custom_call.1} parent=23 // pred_check
          %p115 = pneg %p36
        $region26: #{tpu_custom_call.1} parent=23 // pred_check_branch
          %117 = sbr.rel (%p115) target = $region28
        $region27: #{tpu_custom_call.1} parent=23 // pred_region
          %118 = dma.done %s111, 1024
        $region28: #{tpu_custom_call.1} parent=23 // pred_fallthru
          _
        %s119 = sand.u32 %s23, 1
        %s120 = scalar_lea.sflag [#allocation3], %s119
        %s121 = sand.u32 %s23, 1
        %s122 = smul.addr %s121, 64
        %s123 = scalar_lea.vmem [#allocation2], %s122
        %p124 = pneg %p36
        %p125 = pneg %p33
        %p126 = pneg %p62
        %p127 = pneg %p59
        %s128 = smul.u32 4, %s15
        %p129 = scmp.lt.s32.totalorder %s128, 7
        %s130 = scalar_select %p129, %s128, 7
        %s131 = smul.addr %s130, 3
        %s132 = smul.addr %s131, 8
        %s133 = scalar_lea.vmem %s1, %s132
        %s134 = smul.u32 4, %s15
        %s135 = smul.u32 4, %s15
        %p136 = scmp.lt.s32.totalorder %s135, 7
        %s137 = scalar_select %p136, %s135, 7
        %s138 = smul.addr %s137, 3
        %s139 = smul.addr %s138, 8
        %s140 = scalar_lea.vmem %s1, %s139
        %s141 = smul.u32 4, %s15
        %v142 = vld [vmem:[%s114] sm:$0xff]
        %v143 = vld [vmem:[%s114 + $0x8] sm:$0xff]
        %v144 = vld [vmem:[%s114 + $0x10] sm:$0xff]
        %v145 = vld [vmem:[%s114 + $0x18] sm:$0xff]
        %v146 = vld [vmem:[%s114 + $0x20] sm:$0xff]
        %v147 = vld [vmem:[%s114 + $0x28] sm:$0xff]
        %v148 = vld [vmem:[%s114 + $0x30] sm:$0xff]
        %v149 = vld [vmem:[%s114 + $0x38] sm:$0xff]
        %vm150 = vcmask 130048
        %151 = vst.msk [vmem:[%s140] sm:$0xff] %vm150, %v142
        %152 = vst.msk [vmem:[%s140 + $0x8] sm:$0xff] %vm150, %v143
        %153 = vst.msk [vmem:[%s140 + $0x18] sm:$0xff] %vm150, %v144
        %154 = vst.msk [vmem:[%s140 + $0x20] sm:$0xff] %vm150, %v145
        %155 = vst.msk [vmem:[%s140 + $0x30] sm:$0xff] %vm150, %v146
        %156 = vst.msk [vmem:[%s140 + $0x38] sm:$0xff] %vm150, %v147
        %157 = vst.msk [vmem:[%s140 + $0x48] sm:$0xff] %vm150, %v148
        %158 = vst.msk [vmem:[%s140 + $0x50] sm:$0xff] %vm150, %v149
        %v159 = vld [vmem:[%s114] sm:$0xff]
        %v160 = vld [vmem:[%s114 + $0x8] sm:$0xff]
        %v161 = vld [vmem:[%s114 + $0x10] sm:$0xff]
        %v162 = vld [vmem:[%s114 + $0x18] sm:$0xff]
        %v163 = vld [vmem:[%s114 + $0x20] sm:$0xff]
        %v164 = vld [vmem:[%s114 + $0x28] sm:$0xff]
        %v165 = vld [vmem:[%s114 + $0x30] sm:$0xff]
        %v166 = vld [vmem:[%s114 + $0x38] sm:$0xff]
        %175 = vrot.lane.b32.xlu0 %v159, 2
        %v176 = vpop.permute.xlu0 %175
        %177 = vrot.lane.b32.xlu0 %v160, 2
        %v178 = vpop.permute.xlu0 %177
        %179 = vrot.lane.b32.xlu0 %v161, 2
        %v180 = vpop.permute.xlu0 %179
        %181 = vrot.lane.b32.xlu0 %v162, 2
        %v182 = vpop.permute.xlu0 %181
        %183 = vrot.lane.b32.xlu0 %v163, 2
        %v184 = vpop.permute.xlu0 %183
        %185 = vrot.lane.b32.xlu0 %v164, 2
        %v186 = vpop.permute.xlu0 %185
        %187 = vrot.lane.b32.xlu0 %v165, 2
        %v188 = vpop.permute.xlu0 %187
        %189 = vrot.lane.b32.xlu0 %v166, 2
        %v190 = vpop.permute.xlu0 %189
        %vm199 = vcmask 138368
        %200 = vst.msk [vmem:[%s140] sm:$0xff] %vm199, %v176
        %201 = vst.msk [vmem:[%s140 + $0x8] sm:$0xff] %vm199, %v178
        %202 = vst.msk [vmem:[%s140 + $0x18] sm:$0xff] %vm199, %v180
        %203 = vst.msk [vmem:[%s140 + $0x20] sm:$0xff] %vm199, %v182
        %204 = vst.msk [vmem:[%s140 + $0x30] sm:$0xff] %vm199, %v184
        %205 = vst.msk [vmem:[%s140 + $0x38] sm:$0xff] %vm199, %v186
        %206 = vst.msk [vmem:[%s140 + $0x48] sm:$0xff] %vm199, %v188
        %207 = vst.msk [vmem:[%s140 + $0x50] sm:$0xff] %vm199, %v190
        %v208 = vld [vmem:[%s114] sm:$0xff]
        %v209 = vld [vmem:[%s114 + $0x8] sm:$0xff]
        %v210 = vld [vmem:[%s114 + $0x10] sm:$0xff]
        %v211 = vld [vmem:[%s114 + $0x18] sm:$0xff]
        %v212 = vld [vmem:[%s114 + $0x20] sm:$0xff]
        %v213 = vld [vmem:[%s114 + $0x28] sm:$0xff]
        %v214 = vld [vmem:[%s114 + $0x30] sm:$0xff]
        %v215 = vld [vmem:[%s114 + $0x38] sm:$0xff]
        %224 = vrot.lane.b32.xlu0 %v208, 4
        %v225 = vpop.permute.xlu0 %224
        %226 = vrot.lane.b32.xlu0 %v209, 4
        %v227 = vpop.permute.xlu0 %226
        %228 = vrot.lane.b32.xlu0 %v210, 4
        %v229 = vpop.permute.xlu0 %228
        %230 = vrot.lane.b32.xlu0 %v211, 4
        %v231 = vpop.permute.xlu0 %230
        %232 = vrot.lane.b32.xlu0 %v212, 4
        %v233 = vpop.permute.xlu0 %232
        %234 = vrot.lane.b32.xlu0 %v213, 4
        %v235 = vpop.permute.xlu0 %234
        %236 = vrot.lane.b32.xlu0 %v214, 4
        %v237 = vpop.permute.xlu0 %236
        %238 = vrot.lane.b32.xlu0 %v215, 4
        %v239 = vpop.permute.xlu0 %238
        %vm248 = vcmask 146568
        %249 = vst.msk [vmem:[%s140] sm:$0xff] %vm248, %v225
        %250 = vst.msk [vmem:[%s140 + $0x8] sm:$0xff] %vm248, %v227
        %251 = vst.msk [vmem:[%s140 + $0x18] sm:$0xff] %vm248, %v229
        %252 = vst.msk [vmem:[%s140 + $0x20] sm:$0xff] %vm248, %v231
        %253 = vst.msk [vmem:[%s140 + $0x30] sm:$0xff] %vm248, %v233
        %254 = vst.msk [vmem:[%s140 + $0x38] sm:$0xff] %vm248, %v235
        %255 = vst.msk [vmem:[%s140 + $0x48] sm:$0xff] %vm248, %v237
        %256 = vst.msk [vmem:[%s140 + $0x50] sm:$0xff] %vm248, %v239
        %v257 = vld [vmem:[%s114] sm:$0xff]
        %v258 = vld [vmem:[%s114 + $0x8] sm:$0xff]
        %v259 = vld [vmem:[%s114 + $0x10] sm:$0xff]
        %v260 = vld [vmem:[%s114 + $0x18] sm:$0xff]
        %v261 = vld [vmem:[%s114 + $0x20] sm:$0xff]
        %v262 = vld [vmem:[%s114 + $0x28] sm:$0xff]
        %v263 = vld [vmem:[%s114 + $0x30] sm:$0xff]
        %v264 = vld [vmem:[%s114 + $0x38] sm:$0xff]
        %273 = vrot.lane.b32.xlu0 %v257, 6
        %v274 = vpop.permute.xlu0 %273
        %275 = vrot.lane.b32.xlu0 %v258, 6
        %v276 = vpop.permute.xlu0 %275
        %277 = vrot.lane.b32.xlu0 %v259, 6
        %v278 = vpop.permute.xlu0 %277
        %279 = vrot.lane.b32.xlu0 %v260, 6
        %v280 = vpop.permute.xlu0 %279
        %281 = vrot.lane.b32.xlu0 %v261, 6
        %v282 = vpop.permute.xlu0 %281
        %283 = vrot.lane.b32.xlu0 %v262, 6
        %v284 = vpop.permute.xlu0 %283
        %285 = vrot.lane.b32.xlu0 %v263, 6
        %v286 = vpop.permute.xlu0 %285
        %287 = vrot.lane.b32.xlu0 %v264, 6
        %v288 = vpop.permute.xlu0 %287
        %vm297 = vcmask 154768
        %298 = vst.msk [vmem:[%s140] sm:$0xff] %vm297, %v274
        %299 = vst.msk [vmem:[%s140 + $0x8] sm:$0xff] %vm297, %v276
        %300 = vst.msk [vmem:[%s140 + $0x18] sm:$0xff] %vm297, %v278
        %301 = vst.msk [vmem:[%s140 + $0x20] sm:$0xff] %vm297, %v280
        %302 = vst.msk [vmem:[%s140 + $0x30] sm:$0xff] %vm297, %v282
        %303 = vst.msk [vmem:[%s140 + $0x38] sm:$0xff] %vm297, %v284
        %304 = vst.msk [vmem:[%s140 + $0x48] sm:$0xff] %vm297, %v286
        %305 = vst.msk [vmem:[%s140 + $0x50] sm:$0xff] %vm297, %v288
        %v306 = vld [vmem:[%s114] sm:$0xff]
        %v307 = vld [vmem:[%s114 + $0x8] sm:$0xff]
        %v308 = vld [vmem:[%s114 + $0x10] sm:$0xff]
        %v309 = vld [vmem:[%s114 + $0x18] sm:$0xff]
        %v310 = vld [vmem:[%s114 + $0x20] sm:$0xff]
        %v311 = vld [vmem:[%s114 + $0x28] sm:$0xff]
        %v312 = vld [vmem:[%s114 + $0x30] sm:$0xff]
        %v313 = vld [vmem:[%s114 + $0x38] sm:$0xff]
        %322 = vrot.lane.b32.xlu0 %v306, 8
        %v323 = vpop.permute.xlu0 %322
        %324 = vrot.lane.b32.xlu0 %v307, 8
        %v325 = vpop.permute.xlu0 %324
        %326 = vrot.lane.b32.xlu0 %v308, 8
        %v327 = vpop.permute.xlu0 %326
        %328 = vrot.lane.b32.xlu0 %v309, 8
        %v329 = vpop.permute.xlu0 %328
        %330 = vrot.lane.b32.xlu0 %v310, 8
        %v331 = vpop.permute.xlu0 %330
        %332 = vrot.lane.b32.xlu0 %v311, 8
        %v333 = vpop.permute.xlu0 %332
        %334 = vrot.lane.b32.xlu0 %v312, 8
        %v335 = vpop.permute.xlu0 %334
        %336 = vrot.lane.b32.xlu0 %v313, 8
        %v337 = vpop.permute.xlu0 %336
        %vm346 = vcmask 162968
        %347 = vst.msk [vmem:[%s140] sm:$0xff] %vm346, %v323
        %348 = vst.msk [vmem:[%s140 + $0x8] sm:$0xff] %vm346, %v325
        %349 = vst.msk [vmem:[%s140 + $0x18] sm:$0xff] %vm346, %v327
        %350 = vst.msk [vmem:[%s140 + $0x20] sm:$0xff] %vm346, %v329
        %351 = vst.msk [vmem:[%s140 + $0x30] sm:$0xff] %vm346, %v331
        %352 = vst.msk [vmem:[%s140 + $0x38] sm:$0xff] %vm346, %v333
        %353 = vst.msk [vmem:[%s140 + $0x48] sm:$0xff] %vm346, %v335
        %354 = vst.msk [vmem:[%s140 + $0x50] sm:$0xff] %vm346, %v337
        %v355 = vld [vmem:[%s140 + $0xe] sm:$0x1]
        %v356 = vld [vmem:[%s140 + $0x26] sm:$0x1]
        %v357 = vld [vmem:[%s140 + $0x3e] sm:$0x1]
        %v358 = vld [vmem:[%s140 + $0x56] sm:$0x1]
        %vm359 = vcmask 155648
        %360 = vst.msk [vmem:[%s140 + $0x10] sm:$0x1] %vm359, %v355
        %361 = vst.msk [vmem:[%s140 + $0x28] sm:$0x1] %vm359, %v356
        %362 = vst.msk [vmem:[%s140 + $0x40] sm:$0x1] %vm359, %v357
        %363 = vst.msk [vmem:[%s140 + $0x58] sm:$0x1] %vm359, %v358
        %v364 = vld [vmem:[%s140 + $0xd] sm:$0x1]
        %v365 = vld [vmem:[%s140 + $0x25] sm:$0x1]
        %v366 = vld [vmem:[%s140 + $0x3d] sm:$0x1]
        %v367 = vld [vmem:[%s140 + $0x55] sm:$0x1]
        %368 = vst.msk [vmem:[%s140 + $0x11] sm:$0x1] %vm359, %v364
        %369 = vst.msk [vmem:[%s140 + $0x29] sm:$0x1] %vm359, %v365
        %370 = vst.msk [vmem:[%s140 + $0x41] sm:$0x1] %vm359, %v366
        %371 = vst.msk [vmem:[%s140 + $0x59] sm:$0x1] %vm359, %v367
        %v372 = vld [vmem:[%s140 + $0xc] sm:$0x1]
        %v373 = vld [vmem:[%s140 + $0x24] sm:$0x1]
        %v374 = vld [vmem:[%s140 + $0x3c] sm:$0x1]
        %v375 = vld [vmem:[%s140 + $0x54] sm:$0x1]
        %376 = vst.msk [vmem:[%s140 + $0x12] sm:$0x1] %vm359, %v372
        %377 = vst.msk [vmem:[%s140 + $0x2a] sm:$0x1] %vm359, %v373
        %378 = vst.msk [vmem:[%s140 + $0x42] sm:$0x1] %vm359, %v374
        %379 = vst.msk [vmem:[%s140 + $0x5a] sm:$0x1] %vm359, %v375
        %v380 = vld [vmem:[%s140 + $0xb] sm:$0x1]
        %v381 = vld [vmem:[%s140 + $0x23] sm:$0x1]
        %v382 = vld [vmem:[%s140 + $0x3b] sm:$0x1]
        %v383 = vld [vmem:[%s140 + $0x53] sm:$0x1]
        %384 = vst.msk [vmem:[%s140 + $0x13] sm:$0x1] %vm359, %v380
        %385 = vst.msk [vmem:[%s140 + $0x2b] sm:$0x1] %vm359, %v381
        %386 = vst.msk [vmem:[%s140 + $0x43] sm:$0x1] %vm359, %v382
        %387 = vst.msk [vmem:[%s140 + $0x5b] sm:$0x1] %vm359, %v383
        %s388 = smul.u32 4, %s15
        %p389 = scmp.lt.s32.totalorder %s388, 7
        %s390 = scalar_select %p389, %s388, 7
        %s391 = smul.addr %s390, 3
        %s392 = smul.addr %s391, 8
        %s393 = scalar_lea.vmem %s1, %s392
        // Predicated region
        $region29: #{tpu_custom_call.1} parent=23 // pred_check
          %p394 = pneg %p59
        $region30: #{tpu_custom_call.1} parent=23 // pred_check_branch
          %396 = sbr.rel (%p394) target = $region32
        $region31: #{tpu_custom_call.1} parent=23 // pred_region
          %s397 = smul.u32 4, %s15
        $region32: #{tpu_custom_call.1} parent=23 // pred_fallthru
          _
      $region24: #{tpu_custom_call.1} parent=5 // pred_fallthru
        _
      %p398 = scmp.le.s32.totalorder 2, %s10
      // Predicated region
      $region33: #{tpu_custom_call.1} parent=5 // pred_check
        %p399 = pneg %p398
      $region34: #{tpu_custom_call.1} parent=5 // pred_check_branch
        %401 = sbr.rel (%p399) target = $region36
      $region35: #{tpu_custom_call.1} parent=5 // pred_region
        %s402 = ssub.s32 %s10, 2
        // Predicated region
        $region37: #{tpu_custom_call.1} parent=35 // pred_check
          %p403 = pneg %p65
        $region38: #{tpu_custom_call.1} parent=35 // pred_check_branch
          %405 = sbr.rel (%p403) target = $region40
        $region39: #{tpu_custom_call.1} parent=35 // pred_region
          %s406 = smul.u32 4, %s16
          %p407 = scmp.lt.s32.totalorder %s406, 7
          %s408 = scalar_select %p407, %s406, 7
          %s409 = smul.addr %s408, 3
          %s410 = smul.addr %s409, 8
          %s411 = scalar_lea.vmem %s1, %s410
        $region40: #{tpu_custom_call.1} parent=35 // pred_fallthru
          _
      $region36: #{tpu_custom_call.1} parent=5 // pred_fallthru
        _
    $region6: #{tpu_custom_call.1} parent=1 // loop_footer
      %s14 = sadd.s32 1, %s10
    $region7: #{tpu_custom_call.1} parent=1 // loop_footer_branch
      %9 = sbr.rel target = $region3
    $region8: #{tpu_custom_call.1} parent=1 // loop_exit
      _
    %412 = vsyncpa [#allocation3], 1
    %s413 = scalar_lea.sflag [#allocation3], 1
    %414 = vsyncpa %s413, 1

</llo_original>
